<compile_context>
chip_gen: v5e
topology: v5e:2x2
jax: 0.10.0
libtpu: 0.0.40
codegen_flags: <defaults>
</compile_context>

<pallas_src>
import functools

import jax
import jax.numpy as jnp
from jax.experimental import pallas as pl
from jax.experimental.pallas import tpu as pltpu

_BIG = jnp.iinfo(jnp.int32).max  # "taken / padded" index sentinel


def _round_up(x: int, m: int) -> int:
    return (x + m - 1) // m * m


def _tpu_vmem_capacity_bytes() -> int:
    """Best-effort per-core VMEM capacity (v5e/v6e: 128 MiB, v7x: 64 MiB/TC)."""
    try:
        cap = int(pltpu.get_tpu_info().vmem_capacity_bytes)
        if cap > 0:
            return cap
    except Exception:
        pass
    return 64 * 1024 * 1024  # conservative fallback (v7x per-TensorCore)


def _topk_kernel(x_ref, vals_ref, idx_ref,
                 cand_v_ref, cand_i_ref, work_v_ref, work_i_ref, *,
                 beam_size: int, prob_len: int, block_n: int,
                 work_dtype, mask_partial: bool):
    j = pl.program_id(1)                   # prob_len (reduction) axis, innermost
    tb, tn = x_ref.shape

    # ---- reset the carried candidate pool at the first prob_len tile --------
    # Candidate-pool lane layout:
    #   [0, beam)              running top-beam of all columns seen so far
    #   [beam, 2*beam)         this tile's local top-beam (rewritten every tile)
    #   [2*beam, cand_lanes)   sentinels; written once here and never touched
    #                          again (cross-grid-step invariant).
    @pl.when(j == 0)
    def _():
        cand_v_ref[...] = jnp.full(cand_v_ref.shape, -jnp.inf, cand_v_ref.dtype)
        cand_i_ref[...] = jnp.full(cand_i_ref.shape, _BIG, cand_i_ref.dtype)

    # ---- local top-beam of this tile (full block_n width) -------------------
    gcol = jax.lax.broadcasted_iota(jnp.int32, (tb, tn), 1) + j * block_n
    w = x_ref[...].astype(work_dtype)      # round 0 reads the input block directly
    ids = gcol
    if mask_partial:                       # only the last tile can be partial
        valid = gcol < prob_len
        w = jnp.where(valid, w, -jnp.inf)
        ids = jnp.where(valid, gcol, _BIG)

    for k in range(beam_size):             # small static constant -> unrolled
        m = jnp.max(w, axis=-1, keepdims=True)                        # XLU reduce
        # smallest global index attaining the max (torch.topk tie order);
        # taken / padded lanes carry id=_BIG so they never win the tie-break.
        idx = jnp.min(jnp.where(w == m, ids, _BIG), axis=-1, keepdims=True)
        cand_v_ref[:, pl.ds(beam_size + k, 1)] = m.astype(cand_v_ref.dtype)
        cand_i_ref[:, pl.ds(beam_size + k, 1)] = idx
        if k + 1 < beam_size:              # no mask-out needed after last pick
            sel = ids == idx               # exactly one (or only sentinel) lane
            work_v_ref[...] = jnp.where(sel, -jnp.inf, w)
            work_i_ref[...] = jnp.where(sel, _BIG, ids)
            w = work_v_ref[...]
            ids = work_i_ref[...]

    # ---- merge local beam with carried beam (tiny, cand_lanes wide) ---------
    cv = cand_v_ref[...]                   # snapshot; stores below don't alias it
    ci = cand_i_ref[...]
    for k in range(beam_size):
        m = jnp.max(cv, axis=-1, keepdims=True)
        idx = jnp.min(jnp.where(cv == m, ci, _BIG), axis=-1, keepdims=True)
        cand_v_ref[:, pl.ds(k, 1)] = m
        cand_i_ref[:, pl.ds(k, 1)] = idx
        if k + 1 < beam_size:
            sel = ci == idx
            cv = jnp.where(sel, -jnp.inf, cv)
            ci = jnp.where(sel, _BIG, ci)

    # ---- write the outputs exactly once, at the last prob_len tile ----------
    @pl.when(j == pl.num_programs(1) - 1)
    def _():
        vals_ref[...] = cand_v_ref[:, :beam_size].astype(vals_ref.dtype)
        idx_ref[...] = cand_i_ref[:, :beam_size]


def beam_strategy_topk(dec_out: jax.Array, beam_size: int, *,
                       block_b: int | None = None,
                       block_n: int | None = None):
    """Pallas equivalent of beamStrategy(beam_size)(dec_out).

    Returns:
      (values, indices): values [batch, beam_size] (dtype of dec_out),
                         indices [batch, beam_size] int32.
    """
    batch, prob_len = dec_out.shape
    assert 1 <= beam_size <= prob_len

    # Work-buffer dtype: keep 16-bit float inputs as-is (halves full-width
    # VMEM traffic on v6e/v7x); everything else is promoted to f32.
    if dec_out.dtype in (jnp.bfloat16, jnp.float16, jnp.float32):
        work_dtype = dec_out.dtype
    else:
        work_dtype = jnp.float32

    # ---- batch tile: multiple of 8 sublanes; keep >= 2 grid steps on the ----
    # "parallel" axis when batch allows so both v7x TensorCores stay busy.
    if block_b is None:
        if batch < 8:
            block_b = batch                                  # full-extent block
        else:
            half = -(-batch // 2)                            # ceil(batch / 2)
            block_b = min(128, max(8, (half // 8) * 8))

    # ---- prob_len tile: as large as a per-generation VMEM budget allows -----
    vmem_cap = _tpu_vmem_capacity_bytes()
    if vmem_cap >= 100 * 1024 * 1024:        # v5e / v6e (128 MiB per core)
        vmem_limit = 64 * 1024 * 1024
        tile_budget = 40 * 1024 * 1024
    else:                                    # v7x (64 MiB per TensorCore)
        vmem_limit = 48 * 1024 * 1024
        tile_budget = 24 * 1024 * 1024

    in_bytes = dec_out.dtype.itemsize
    work_bytes = jnp.dtype(work_dtype).itemsize
    if block_n is None:
        # 2x double-buffered input + value scratch + int32 id scratch per column
        per_col = block_b * (2 * in_bytes + work_bytes + 4)
        block_n = min(8192, max(128, (tile_budget // per_col) // 128 * 128))
    block_n = max(block_n, min(prob_len, _round_up(beam_size, 128)))
    if block_n >= prob_len:
        block_n = prob_len                   # single full-extent prob_len tile
    mask_partial = prob_len % block_n != 0

    cand_lanes = max(128, _round_up(2 * beam_size, 128))
    grid = (pl.cdiv(batch, block_b), pl.cdiv(prob_len, block_n))

    kernel = functools.partial(
        _topk_kernel, beam_size=beam_size, prob_len=prob_len, block_n=block_n,
        work_dtype=work_dtype, mask_partial=mask_partial)

    cost = pl.CostEstimate(
        flops=3 * beam_size * batch * prob_len,
        transcendentals=0,
        bytes_accessed=batch * prob_len * in_bytes + 2 * batch * beam_size * 4)

    return pl.pallas_call(
        kernel,
        out_shape=(
            jax.ShapeDtypeStruct((batch, beam_size), dec_out.dtype),
            jax.ShapeDtypeStruct((batch, beam_size), jnp.int32),
        ),
        grid_spec=pltpu.PrefetchScalarGridSpec(
            num_scalar_prefetch=0,
            grid=grid,
            in_specs=[pl.BlockSpec((block_b, block_n), lambda i, j: (i, j))],
            out_specs=(
                pl.BlockSpec((block_b, beam_size), lambda i, j: (i, 0)),
                pl.BlockSpec((block_b, beam_size), lambda i, j: (i, 0)),
            ),
            scratch_shapes=[
                pltpu.VMEM((block_b, cand_lanes), jnp.float32),  # candidate values
                pltpu.VMEM((block_b, cand_lanes), jnp.int32),    # candidate indices
                pltpu.VMEM((block_b, block_n), work_dtype),      # full-width values
                pltpu.VMEM((block_b, block_n), jnp.int32),       # full-width ids
            ],
        ),
        compiler_params=pltpu.CompilerParams(
            dimension_semantics=("parallel", "arbitrary"),
            vmem_limit_bytes=vmem_limit,
        ),
        cost_estimate=cost,
    )(dec_out)


if __name__ == "__main__":
    key = jax.random.PRNGKey(0)
    k1, k2, k3, k4 = jax.random.split(key, 4)

    # --- test 1: multi-tile grid on both axes (2 batch tiles x 4 prob tiles) ---
    batch, prob_len, beam = 16, 512, 3
    dec_out = jax.random.normal(k1, (batch, prob_len), dtype=jnp.float32)
    values, indices = beam_strategy_topk(dec_out, beam, block_b=8, block_n=128)
    values, indices = jax.block_until_ready((values, indices))
    ref_v, ref_i = jax.lax.top_k(dec_out, beam)
    assert values.shape == (batch, beam) and indices.shape == (batch, beam)
    assert jnp.allclose(values, ref_v, atol=1e-6)
    assert jnp.array_equal(indices, ref_i.astype(jnp.int32))

    # --- test 2: ragged prob_len (partial last prob tile masked in-kernel) ----
    dec_out2 = jax.random.normal(k2, (8, 320), dtype=jnp.float32)
    v2, i2 = beam_strategy_topk(dec_out2, 4, block_b=8, block_n=128)
    v2, i2 = jax.block_until_ready((v2, i2))
    rv2, ri2 = jax.lax.top_k(dec_out2, 4)
    assert jnp.allclose(v2, rv2, atol=1e-6)
    assert jnp.array_equal(i2, ri2.astype(jnp.int32))

    # --- test 3: default (auto) tiling path, ragged batch ---------------------
    dec_out3 = jax.random.normal(k3, (10, 384), dtype=jnp.float32)
    v3, i3 = beam_strategy_topk(dec_out3, 2)
    v3, i3 = jax.block_until_ready((v3, i3))
    rv3, ri3 = jax.lax.top_k(dec_out3, 2)
    assert jnp.allclose(v3, rv3, atol=1e-6)
    assert jnp.array_equal(i3, ri3.astype(jnp.int32))

    # --- test 4: degenerate rows (-inf / fewer than beam finite values) must
    #             still yield `beam` distinct, in-range indices ---------------
    beam4 = 3
    dec_out4 = jax.random.normal(k4, (8, 256), dtype=jnp.float32)
    dec_out4 = dec_out4.at[0, :].set(-jnp.inf)               # fully -inf row
    dec_out4 = dec_out4.at[1, :].set(-jnp.inf)
    dec_out4 = dec_out4.at[1, 200].set(1.5)                  # single finite value
    v4, i4 = beam_strategy_topk(dec_out4, beam4, block_b=8, block_n=128)
    v4, i4 = jax.block_until_ready((v4, i4))
    rv4, _ = jax.lax.top_k(dec_out4, beam4)
    assert jnp.allclose(v4, rv4)                             # values incl. -inf
    assert bool(jnp.all((i4 >= 0) & (i4 < 256)))
    srt4 = jnp.sort(i4, axis=-1)
    assert bool(jnp.all(srt4[:, 1:] != srt4[:, :-1]))        # distinct per row
    g4 = jnp.take_along_axis(dec_out4, i4, axis=-1)
    assert jnp.allclose(g4, v4)

    # --- test 5: bf16 input exercises the bf16 work-buffer path ---------------
    dec_out5 = jax.random.normal(k1, (8, 256), dtype=jnp.bfloat16)
    v5, i5 = beam_strategy_topk(dec_out5, 2, block_b=8, block_n=128)
    v5, i5 = jax.block_until_ready((v5, i5))
    rv5, _ = jax.lax.top_k(dec_out5, 2)
    assert v5.dtype == jnp.bfloat16
    assert jnp.array_equal(v5, rv5)                          # top-k values exact
    g5 = jnp.take_along_axis(dec_out5, i5, axis=-1)
    assert jnp.array_equal(g5, v5)
    srt5 = jnp.sort(i5, axis=-1)
    assert bool(jnp.all(srt5[:, 1:] != srt5[:, :-1]))

    print("KERNEL_OK")
</pallas_src>

<mosaic_0001>
module attributes {stable_mosaic.version = 11 : i64} {
  func.func @_topk_kernel(%arg0: i32, %arg1: i32, %arg2: memref<8x128xf32, #tpu.memory_space<vmem>>, %arg3: memref<8x3xf32, #tpu.memory_space<vmem>>, %arg4: memref<8x3xi32, #tpu.memory_space<vmem>>, %arg5: memref<8x128xf32, #tpu.memory_space<vmem>>, %arg6: memref<8x128xi32, #tpu.memory_space<vmem>>, %arg7: memref<8x128xf32, #tpu.memory_space<vmem>>, %arg8: memref<8x128xi32, #tpu.memory_space<vmem>>) attributes {dimension_semantics = [#tpu.dimension_semantics<parallel>, #tpu.dimension_semantics<arbitrary>], iteration_bounds = array<i64: 2, 4>, scalar_prefetch = 0 : i64, scratch_operands = 4 : i64, tpu.core_type = #tpu.core_type<tc>, window_params = [{transform_indices = @transform_0, window_bounds = array<i64: 8, 128>}, {transform_indices = @transform_1, window_bounds = array<i64: 8, 3>}, {transform_indices = @transform_2, window_bounds = array<i64: 8, 3>}]} {
    %c0_i32 = arith.constant 0 : i32
    %0 = arith.cmpi eq, %arg1, %c0_i32 : i32
    %1 = arith.extui %0 : i1 to i32
    %c0_i32_0 = arith.constant 0 : i32
    %2 = arith.cmpi ne, %1, %c0_i32_0 : i32
    scf.if %2 {
      %cst_66 = arith.constant 0xFF800000 : f32
      %105 = vector.broadcast %cst_66 : f32 to vector<8x128xf32>
      %c0_67 = arith.constant 0 : index
      %c0_68 = arith.constant 0 : index
      %106 = vector.load %arg5[%c0_67, %c0_68] : memref<8x128xf32, #tpu.memory_space<vmem>>, vector<8x128xf32>
      tpu.vector_store %arg5[%c0_67, %c0_68], %105 {strides = array<i32>} : memref<8x128xf32, #tpu.memory_space<vmem>>, vector<8x128xf32>,
      %c2147483647_i32_69 = arith.constant 2147483647 : i32
      %107 = vector.broadcast %c2147483647_i32_69 : i32 to vector<8x128xi32>
      %c0_70 = arith.constant 0 : index
      %c0_71 = arith.constant 0 : index
      %108 = vector.load %arg6[%c0_70, %c0_71] : memref<8x128xi32, #tpu.memory_space<vmem>>, vector<8x128xi32>
      tpu.vector_store %arg6[%c0_70, %c0_71], %107 {strides = array<i32>} : memref<8x128xi32, #tpu.memory_space<vmem>>, vector<8x128xi32>,
    } else {
    }
    %3 = tpu.iota {dimensions = array<i32: 1>} : vector<8x128xi32>
    %c128_i32 = arith.constant 128 : i32
    %4 = arith.muli %arg1, %c128_i32 : i32
    %5 = vector.broadcast %4 : i32 to vector<8x128xi32>
    %6 = arith.addi %3, %5 : vector<8x128xi32>
    %c0 = arith.constant 0 : index
    %c0_1 = arith.constant 0 : index
    %7 = vector.load %arg2[%c0, %c0_1] : memref<8x128xf32, #tpu.memory_space<vmem>>, vector<8x128xf32>
    %cst = arith.constant dense<0xFF800000> : vector<8xf32>
    %8 = vector.multi_reduction <maximumf>, %7, %cst [1] : vector<8x128xf32> to vector<8xf32>
    %9 = vector.shape_cast %8 : vector<8xf32> to vector<8x1xf32>
    %10 = vector.broadcast %9 : vector<8x1xf32> to vector<8x128xf32>
    %11 = arith.cmpf oeq, %7, %10 : vector<8x128xf32>
    %c2147483647_i32 = arith.constant 2147483647 : i32
    %12 = vector.broadcast %c2147483647_i32 : i32 to vector<8x128xi32>
    %13 = arith.select %11, %6, %12 : vector<8x128xi1>, vector<8x128xi32>
    %cst_2 = arith.constant dense<2147483647> : vector<8xi32>
    %14 = vector.multi_reduction <minsi>, %13, %cst_2 [1] : vector<8x128xi32> to vector<8xi32>
    %15 = vector.shape_cast %14 : vector<8xi32> to vector<8x1xi32>
    %c0_3 = arith.constant 0 : index
    %c3 = arith.constant 3 : index
    %16 = vector.load %arg5[%c0_3, %c3] : memref<8x128xf32, #tpu.memory_space<vmem>>, vector<8x1xf32>
    tpu.vector_store %arg5[%c0_3, %c3], %9 {strides = array<i32>} : memref<8x128xf32, #tpu.memory_space<vmem>>, vector<8x1xf32>,
    %c0_4 = arith.constant 0 : index
    %c3_5 = arith.constant 3 : index
    %17 = vector.load %arg6[%c0_4, %c3_5] : memref<8x128xi32, #tpu.memory_space<vmem>>, vector<8x1xi32>
    tpu.vector_store %arg6[%c0_4, %c3_5], %15 {strides = array<i32>} : memref<8x128xi32, #tpu.memory_space<vmem>>, vector<8x1xi32>,
    %18 = vector.broadcast %15 : vector<8x1xi32> to vector<8x128xi32>
    %19 = arith.cmpi eq, %6, %18 : vector<8x128xi32>
    %cst_6 = arith.constant 0xFF800000 : f32
    %20 = vector.broadcast %cst_6 : f32 to vector<8x128xf32>
    %21 = arith.select %19, %20, %7 : vector<8x128xi1>, vector<8x128xf32>
    %c0_7 = arith.constant 0 : index
    %c0_8 = arith.constant 0 : index
    %22 = vector.load %arg7[%c0_7, %c0_8] : memref<8x128xf32, #tpu.memory_space<vmem>>, vector<8x128xf32>
    tpu.vector_store %arg7[%c0_7, %c0_8], %21 {strides = array<i32>} : memref<8x128xf32, #tpu.memory_space<vmem>>, vector<8x128xf32>,
    %c2147483647_i32_9 = arith.constant 2147483647 : i32
    %23 = vector.broadcast %c2147483647_i32_9 : i32 to vector<8x128xi32>
    %24 = arith.select %19, %23, %6 : vector<8x128xi1>, vector<8x128xi32>
    %c0_10 = arith.constant 0 : index
    %c0_11 = arith.constant 0 : index
    %25 = vector.load %arg8[%c0_10, %c0_11] : memref<8x128xi32, #tpu.memory_space<vmem>>, vector<8x128xi32>
    tpu.vector_store %arg8[%c0_10, %c0_11], %24 {strides = array<i32>} : memref<8x128xi32, #tpu.memory_space<vmem>>, vector<8x128xi32>,
    %c0_12 = arith.constant 0 : index
    %c0_13 = arith.constant 0 : index
    %26 = vector.load %arg7[%c0_12, %c0_13] : memref<8x128xf32, #tpu.memory_space<vmem>>, vector<8x128xf32>
    %c0_14 = arith.constant 0 : index
    %c0_15 = arith.constant 0 : index
    %27 = vector.load %arg8[%c0_14, %c0_15] : memref<8x128xi32, #tpu.memory_space<vmem>>, vector<8x128xi32>
    %cst_16 = arith.constant dense<0xFF800000> : vector<8xf32>
    %28 = vector.multi_reduction <maximumf>, %26, %cst_16 [1] : vector<8x128xf32> to vector<8xf32>
    %29 = vector.shape_cast %28 : vector<8xf32> to vector<8x1xf32>
    %30 = vector.broadcast %29 : vector<8x1xf32> to vector<8x128xf32>
    %31 = arith.cmpf oeq, %26, %30 : vector<8x128xf32>
    %c2147483647_i32_17 = arith.constant 2147483647 : i32
    %32 = vector.broadcast %c2147483647_i32_17 : i32 to vector<8x128xi32>
    %33 = arith.select %31, %27, %32 : vector<8x128xi1>, vector<8x128xi32>
    %cst_18 = arith.constant dense<2147483647> : vector<8xi32>
    %34 = vector.multi_reduction <minsi>, %33, %cst_18 [1] : vector<8x128xi32> to vector<8xi32>
    %35 = vector.shape_cast %34 : vector<8xi32> to vector<8x1xi32>
    %c0_19 = arith.constant 0 : index
    %c4 = arith.constant 4 : index
    %36 = vector.load %arg5[%c0_19, %c4] : memref<8x128xf32, #tpu.memory_space<vmem>>, vector<8x1xf32>
    tpu.vector_store %arg5[%c0_19, %c4], %29 {strides = array<i32>} : memref<8x128xf32, #tpu.memory_space<vmem>>, vector<8x1xf32>,
    %c0_20 = arith.constant 0 : index
    %c4_21 = arith.constant 4 : index
    %37 = vector.load %arg6[%c0_20, %c4_21] : memref<8x128xi32, #tpu.memory_space<vmem>>, vector<8x1xi32>
    tpu.vector_store %arg6[%c0_20, %c4_21], %35 {strides = array<i32>} : memref<8x128xi32, #tpu.memory_space<vmem>>, vector<8x1xi32>,
    %38 = vector.broadcast %35 : vector<8x1xi32> to vector<8x128xi32>
    %39 = arith.cmpi eq, %27, %38 : vector<8x128xi32>
    %cst_22 = arith.constant 0xFF800000 : f32
    %40 = vector.broadcast %cst_22 : f32 to vector<8x128xf32>
    %41 = arith.select %39, %40, %26 : vector<8x128xi1>, vector<8x128xf32>
    %c0_23 = arith.constant 0 : index
    %c0_24 = arith.constant 0 : index
    %42 = vector.load %arg7[%c0_23, %c0_24] : memref<8x128xf32, #tpu.memory_space<vmem>>, vector<8x128xf32>
    tpu.vector_store %arg7[%c0_23, %c0_24], %41 {strides = array<i32>} : memref<8x128xf32, #tpu.memory_space<vmem>>, vector<8x128xf32>,
    %c2147483647_i32_25 = arith.constant 2147483647 : i32
    %43 = vector.broadcast %c2147483647_i32_25 : i32 to vector<8x128xi32>
    %44 = arith.select %39, %43, %27 : vector<8x128xi1>, vector<8x128xi32>
    %c0_26 = arith.constant 0 : index
    %c0_27 = arith.constant 0 : index
    %45 = vector.load %arg8[%c0_26, %c0_27] : memref<8x128xi32, #tpu.memory_space<vmem>>, vector<8x128xi32>
    tpu.vector_store %arg8[%c0_26, %c0_27], %44 {strides = array<i32>} : memref<8x128xi32, #tpu.memory_space<vmem>>, vector<8x128xi32>,
    %c0_28 = arith.constant 0 : index
    %c0_29 = arith.constant 0 : index
    %46 = vector.load %arg7[%c0_28, %c0_29] : memref<8x128xf32, #tpu.memory_space<vmem>>, vector<8x128xf32>
    %c0_30 = arith.constant 0 : index
    %c0_31 = arith.constant 0 : index
    %47 = vector.load %arg8[%c0_30, %c0_31] : memref<8x128xi32, #tpu.memory_space<vmem>>, vector<8x128xi32>
    %cst_32 = arith.constant dense<0xFF800000> : vector<8xf32>
    %48 = vector.multi_reduction <maximumf>, %46, %cst_32 [1] : vector<8x128xf32> to vector<8xf32>
    %49 = vector.shape_cast %48 : vector<8xf32> to vector<8x1xf32>
    %50 = vector.broadcast %49 : vector<8x1xf32> to vector<8x128xf32>
    %51 = arith.cmpf oeq, %46, %50 : vector<8x128xf32>
    %c2147483647_i32_33 = arith.constant 2147483647 : i32
    %52 = vector.broadcast %c2147483647_i32_33 : i32 to vector<8x128xi32>
    %53 = arith.select %51, %47, %52 : vector<8x128xi1>, vector<8x128xi32>
    %cst_34 = arith.constant dense<2147483647> : vector<8xi32>
    %54 = vector.multi_reduction <minsi>, %53, %cst_34 [1] : vector<8x128xi32> to vector<8xi32>
    %55 = vector.shape_cast %54 : vector<8xi32> to vector<8x1xi32>
    %c0_35 = arith.constant 0 : index
    %c5 = arith.constant 5 : index
    %56 = vector.load %arg5[%c0_35, %c5] : memref<8x128xf32, #tpu.memory_space<vmem>>, vector<8x1xf32>
    tpu.vector_store %arg5[%c0_35, %c5], %49 {strides = array<i32>} : memref<8x128xf32, #tpu.memory_space<vmem>>, vector<8x1xf32>,
    %c0_36 = arith.constant 0 : index
    %c5_37 = arith.constant 5 : index
    %57 = vector.load %arg6[%c0_36, %c5_37] : memref<8x128xi32, #tpu.memory_space<vmem>>, vector<8x1xi32>
    tpu.vector_store %arg6[%c0_36, %c5_37], %55 {strides = array<i32>} : memref<8x128xi32, #tpu.memory_space<vmem>>, vector<8x1xi32>,
    %c0_38 = arith.constant 0 : index
    %c0_39 = arith.constant 0 : index
    %58 = vector.load %arg5[%c0_38, %c0_39] : memref<8x128xf32, #tpu.memory_space<vmem>>, vector<8x128xf32>
    %c0_40 = arith.constant 0 : index
    %c0_41 = arith.constant 0 : index
    %59 = vector.load %arg6[%c0_40, %c0_41] : memref<8x128xi32, #tpu.memory_space<vmem>>, vector<8x128xi32>
    %cst_42 = arith.constant dense<0xFF800000> : vector<8xf32>
    %60 = vector.multi_reduction <maximumf>, %58, %cst_42 [1] : vector<8x128xf32> to vector<8xf32>
    %61 = vector.shape_cast %60 : vector<8xf32> to vector<8x1xf32>
    %62 = vector.broadcast %61 : vector<8x1xf32> to vector<8x128xf32>
    %63 = arith.cmpf oeq, %58, %62 : vector<8x128xf32>
    %c2147483647_i32_43 = arith.constant 2147483647 : i32
    %64 = vector.broadcast %c2147483647_i32_43 : i32 to vector<8x128xi32>
    %65 = arith.select %63, %59, %64 : vector<8x128xi1>, vector<8x128xi32>
    %cst_44 = arith.constant dense<2147483647> : vector<8xi32>
    %66 = vector.multi_reduction <minsi>, %65, %cst_44 [1] : vector<8x128xi32> to vector<8xi32>
    %67 = vector.shape_cast %66 : vector<8xi32> to vector<8x1xi32>
    %c0_45 = arith.constant 0 : index
    %c0_46 = arith.constant 0 : index
    %68 = vector.load %arg5[%c0_45, %c0_46] : memref<8x128xf32, #tpu.memory_space<vmem>>, vector<8x1xf32>
    tpu.vector_store %arg5[%c0_45, %c0_46], %61 {strides = array<i32>} : memref<8x128xf32, #tpu.memory_space<vmem>>, vector<8x1xf32>,
    %c0_47 = arith.constant 0 : index
    %c0_48 = arith.constant 0 : index
    %69 = vector.load %arg6[%c0_47, %c0_48] : memref<8x128xi32, #tpu.memory_space<vmem>>, vector<8x1xi32>
    tpu.vector_store %arg6[%c0_47, %c0_48], %67 {strides = array<i32>} : memref<8x128xi32, #tpu.memory_space<vmem>>, vector<8x1xi32>,
    %70 = vector.broadcast %67 : vector<8x1xi32> to vector<8x128xi32>
    %71 = arith.cmpi eq, %59, %70 : vector<8x128xi32>
    %cst_49 = arith.constant 0xFF800000 : f32
    %72 = vector.broadcast %cst_49 : f32 to vector<8x128xf32>
    %73 = arith.select %71, %72, %58 : vector<8x128xi1>, vector<8x128xf32>
    %c2147483647_i32_50 = arith.constant 2147483647 : i32
    %74 = vector.broadcast %c2147483647_i32_50 : i32 to vector<8x128xi32>
    %75 = arith.select %71, %74, %59 : vector<8x128xi1>, vector<8x128xi32>
    %cst_51 = arith.constant dense<0xFF800000> : vector<8xf32>
    %76 = vector.multi_reduction <maximumf>, %73, %cst_51 [1] : vector<8x128xf32> to vector<8xf32>
    %77 = vector.shape_cast %76 : vector<8xf32> to vector<8x1xf32>
    %78 = vector.broadcast %77 : vector<8x1xf32> to vector<8x128xf32>
    %79 = arith.cmpf oeq, %73, %78 : vector<8x128xf32>
    %c2147483647_i32_52 = arith.constant 2147483647 : i32
    %80 = vector.broadcast %c2147483647_i32_52 : i32 to vector<8x128xi32>
    %81 = arith.select %79, %75, %80 : vector<8x128xi1>, vector<8x128xi32>
    %cst_53 = arith.constant dense<2147483647> : vector<8xi32>
    %82 = vector.multi_reduction <minsi>, %81, %cst_53 [1] : vector<8x128xi32> to vector<8xi32>
    %83 = vector.shape_cast %82 : vector<8xi32> to vector<8x1xi32>
    %c0_54 = arith.constant 0 : index
    %c1 = arith.constant 1 : index
    %84 = vector.load %arg5[%c0_54, %c1] : memref<8x128xf32, #tpu.memory_space<vmem>>, vector<8x1xf32>
    tpu.vector_store %arg5[%c0_54, %c1], %77 {strides = array<i32>} : memref<8x128xf32, #tpu.memory_space<vmem>>, vector<8x1xf32>,
    %c0_55 = arith.constant 0 : index
    %c1_56 = arith.constant 1 : index
    %85 = vector.load %arg6[%c0_55, %c1_56] : memref<8x128xi32, #tpu.memory_space<vmem>>, vector<8x1xi32>
    tpu.vector_store %arg6[%c0_55, %c1_56], %83 {strides = array<i32>} : memref<8x128xi32, #tpu.memory_space<vmem>>, vector<8x1xi32>,
    %86 = vector.broadcast %83 : vector<8x1xi32> to vector<8x128xi32>
    %87 = arith.cmpi eq, %75, %86 : vector<8x128xi32>
    %cst_57 = arith.constant 0xFF800000 : f32
    %88 = vector.broadcast %cst_57 : f32 to vector<8x128xf32>
    %89 = arith.select %87, %88, %73 : vector<8x128xi1>, vector<8x128xf32>
    %c2147483647_i32_58 = arith.constant 2147483647 : i32
    %90 = vector.broadcast %c2147483647_i32_58 : i32 to vector<8x128xi32>
    %91 = arith.select %87, %90, %75 : vector<8x128xi1>, vector<8x128xi32>
    %cst_59 = arith.constant dense<0xFF800000> : vector<8xf32>
    %92 = vector.multi_reduction <maximumf>, %89, %cst_59 [1] : vector<8x128xf32> to vector<8xf32>
    %93 = vector.shape_cast %92 : vector<8xf32> to vector<8x1xf32>
    %94 = vector.broadcast %93 : vector<8x1xf32> to vector<8x128xf32>
    %95 = arith.cmpf oeq, %89, %94 : vector<8x128xf32>
    %c2147483647_i32_60 = arith.constant 2147483647 : i32
    %96 = vector.broadcast %c2147483647_i32_60 : i32 to vector<8x128xi32>
    %97 = arith.select %95, %91, %96 : vector<8x128xi1>, vector<8x128xi32>
    %cst_61 = arith.constant dense<2147483647> : vector<8xi32>
    %98 = vector.multi_reduction <minsi>, %97, %cst_61 [1] : vector<8x128xi32> to vector<8xi32>
    %99 = vector.shape_cast %98 : vector<8xi32> to vector<8x1xi32>
    %c0_62 = arith.constant 0 : index
    %c2 = arith.constant 2 : index
    %100 = vector.load %arg5[%c0_62, %c2] : memref<8x128xf32, #tpu.memory_space<vmem>>, vector<8x1xf32>
    tpu.vector_store %arg5[%c0_62, %c2], %93 {strides = array<i32>} : memref<8x128xf32, #tpu.memory_space<vmem>>, vector<8x1xf32>,
    %c0_63 = arith.constant 0 : index
    %c2_64 = arith.constant 2 : index
    %101 = vector.load %arg6[%c0_63, %c2_64] : memref<8x128xi32, #tpu.memory_space<vmem>>, vector<8x1xi32>
    tpu.vector_store %arg6[%c0_63, %c2_64], %99 {strides = array<i32>} : memref<8x128xi32, #tpu.memory_space<vmem>>, vector<8x1xi32>,
    %c3_i32 = arith.constant 3 : i32
    %102 = arith.cmpi eq, %arg1, %c3_i32 : i32
    %103 = arith.extui %102 : i1 to i32
    %c0_i32_65 = arith.constant 0 : i32
    %104 = arith.cmpi ne, %103, %c0_i32_65 : i32
    scf.if %104 {
      %c0_66 = arith.constant 0 : index
      %c0_67 = arith.constant 0 : index
      %105 = vector.load %arg5[%c0_66, %c0_67] : memref<8x128xf32, #tpu.memory_space<vmem>>, vector<8x3xf32>
      %c0_68 = arith.constant 0 : index
      %c0_69 = arith.constant 0 : index
      %106 = vector.load %arg3[%c0_68, %c0_69] : memref<8x3xf32, #tpu.memory_space<vmem>>, vector<8x3xf32>
      tpu.vector_store %arg3[%c0_68, %c0_69], %105 {strides = array<i32>} : memref<8x3xf32, #tpu.memory_space<vmem>>, vector<8x3xf32>,
      %c0_70 = arith.constant 0 : index
      %c0_71 = arith.constant 0 : index
      %107 = vector.load %arg6[%c0_70, %c0_71] : memref<8x128xi32, #tpu.memory_space<vmem>>, vector<8x3xi32>
      %c0_72 = arith.constant 0 : index
      %c0_73 = arith.constant 0 : index
      %108 = vector.load %arg4[%c0_72, %c0_73] : memref<8x3xi32, #tpu.memory_space<vmem>>, vector<8x3xi32>
      tpu.vector_store %arg4[%c0_72, %c0_73], %107 {strides = array<i32>} : memref<8x3xi32, #tpu.memory_space<vmem>>, vector<8x3xi32>,
    } else {
    }
    return
  }
  func.func @transform_0(%arg0: i32, %arg1: i32) -> (i32, i32) {
    %c0_i32 = arith.constant 0 : i32
    return %arg0, %arg1 : i32, i32
  }
  func.func @transform_1(%arg0: i32, %arg1: i32) -> (i32, i32) {
    %c0_i32 = arith.constant 0 : i32
    %c0_i32_0 = arith.constant 0 : i32
    return %arg0, %c0_i32 : i32, i32
  }
  func.func @transform_2(%arg0: i32, %arg1: i32) -> (i32, i32) {
    %c0_i32 = arith.constant 0 : i32
    %c0_i32_0 = arith.constant 0 : i32
    return %arg0, %c0_i32 : i32, i32
  }
}

</mosaic_0001>

<llo_original>
// kernel: tpu_custom_call.1
$region0: #{tpu_custom_call.1}
  #allocation0 [shape = 'u32[]', space=smem, size = 0x4, offset = 0x4, fixed_abs, tag = 'smem constant byte address 0x4 - core index']
  #allocation1 [shape = 'u32[72,128]{1,0:T(1,128)}', space=vmem, size = 0x9000, scoped, tag = 'internal scratch']
  #allocation2 [shape = 'f32[8,128]{1,0:T(8,128)}', space=vmem, size = 0x1000, scoped, tag = 'scratch operand']
  #allocation3 [shape = 's32[8,128]{1,0:T(8,128)}', space=vmem, size = 0x1000, scoped, tag = 'scratch operand']
  #allocation4 [shape = 'f32[8,128]{1,0:T(8,128)}', space=vmem, size = 0x1000, scoped, tag = 'scratch operand']
  #allocation5 [shape = 's32[8,128]{1,0:T(8,128)}', space=vmem, size = 0x1000, scoped, tag = 'scratch operand']
  %s0 = inlined_call_operand.hbm [shape: f32[16,512], index: 0, kind: input, shape index: {}]
  %s1 = inlined_call_operand.vmem [shape: f32[16,3], index: 1, kind: output, shape index: {0}]
  %s2 = inlined_call_operand.vmem [shape: s32[16,3], index: 2, kind: output, shape index: {1}]
  %3 = xla_tuple %s1, %s2
  %s4 = sld [smem:[#allocation0]]
  $region57: #{tpu_custom_call.1} parent=0
    _
  %s6 = ssub.s32 1, %s4
  %s7 = scalar_select 0, %s6, %s4
  $region1: #{tpu_custom_call.1} parent=0
    #allocation6 [shape = 'u8[8192]{0}', space=vmem, size = 0x2000, scoped, tag = 'input window, operand 0']
    #allocation7 [shape = 's32[2]{0}', space=sflag, size = 0x8, scoped, tag = 'scoped memory for tpu_custom_call.1']
    %8 = vsyncpa [#allocation7], 0
    %s9 = scalar_lea.sflag [#allocation7], 1
    %10 = vsyncpa %s9, 0
    loop: start=0, step=1, limit=10
    $region2: #{tpu_custom_call.1} parent=1 // loop_pre_header
      _
    $region3: #{tpu_custom_call.1} parent=1 // loop_header
      %s12 = sphi 0, %s16
      %p13 = scmp.ge.s32.totalorder %s12, 10
      %s19 = sphi 0, %s31
      %s20 = sphi 0, %s27
      %s21 = sphi 0, %s19
      %s22 = sphi 0, %s20
      %s23 = sphi 0, %s21
      %s24 = sphi 0, %s22
      %s36 = sphi 0, %s38
      %s39 = sphi 0, %s36
      %s40 = sphi 0, %s39
      %s56 = sphi 0, %s40
      %s62 = sphi 0, %s64
      %s65 = sphi 0, %s62
      %s66 = sphi 0, %s65
      %s82 = sphi 0, %s66
      %s88 = sphi 0, %s90
      %s91 = sphi 0, %s88
      %s92 = sphi 0, %s91
      %s108 = sphi 0, %s92
    $region4: #{tpu_custom_call.1} parent=1 // loop_header_branch
      %15 = sbr.rel (%p13) target = $region8
    $region5: #{tpu_custom_call.1} parent=1 // loop_body
      %s17 = ssub.s32 %s12, 1
      %s18 = ssub.s32 %s12, 2
      %s25 = sadd.s32 1, %s20
      %p26 = scmp.ge.s32.totalorder %s25, 4
      %s27 = scalar_select %p26, 0, %s25
      %s28 = sadd.s32 1, %s19
      %s29 = scalar_select %p26, %s28, %s19
      %p30 = scmp.ge.s32.totalorder %s29, 2
      %s31 = scalar_select %p30, 0, %s29
      %s32 = ssub.s32 %s19, %s31
      %s33 = ssub.s32 %s20, %s27
      %s34 = sor.u32 %s32, %s33
      %p35 = scmp.eq.s32.totalorder %s34, 0
      %s37 = sadd.s32 %s36, 1
      %s38 = scalar_select %p35, %s36, %s37
      %p41 = pneg %p35
      %p42 = scmp.eq.s32.totalorder %s12, 7
      %p43 = por %p41, %p42
      %p44 = scmp.ne.s32.totalorder %s36, %s39
      %p45 = scmp.eq.s32.totalorder %s12, 0
      %p46 = por %p44, %p45
      %p47 = scmp.ne.s32.totalorder %s36, %s39
      %p48 = scmp.eq.s32.totalorder %s17, 7
      %p49 = por %p47, %p48
      %p50 = scmp.ne.s32.totalorder %s39, %s40
      %p51 = scmp.eq.s32.totalorder %s17, 0
      %p52 = por %p50, %p51
      %p53 = scmp.ne.s32.totalorder %s39, %s40
      %p54 = scmp.eq.s32.totalorder %s18, 7
      %p55 = por %p53, %p54
      %p57 = scmp.ne.s32.totalorder %s40, %s56
      %p58 = scmp.eq.s32.totalorder %s18, 0
      %p59 = por %p57, %p58
      %s60 = ssub.s32 %s19, %s31
      %p61 = scmp.eq.s32.totalorder %s60, 0
      %s63 = sadd.s32 %s62, 1
      %s64 = scalar_select %p61, %s62, %s63
      %p67 = pneg %p61
      %p68 = scmp.eq.s32.totalorder %s12, 7
      %p69 = por %p67, %p68
      %p70 = scmp.ne.s32.totalorder %s62, %s65
      %p71 = scmp.eq.s32.totalorder %s12, 0
      %p72 = por %p70, %p71
      %p73 = scmp.ne.s32.totalorder %s62, %s65
      %p74 = scmp.eq.s32.totalorder %s17, 7
      %p75 = por %p73, %p74
      %p76 = scmp.ne.s32.totalorder %s65, %s66
      %p77 = scmp.eq.s32.totalorder %s17, 0
      %p78 = por %p76, %p77
      %p79 = scmp.ne.s32.totalorder %s65, %s66
      %p80 = scmp.eq.s32.totalorder %s18, 7
      %p81 = por %p79, %p80
      %p83 = scmp.ne.s32.totalorder %s66, %s82
      %p84 = scmp.eq.s32.totalorder %s18, 0
      %p85 = por %p83, %p84
      %s86 = ssub.s32 %s19, %s31
      %p87 = scmp.eq.s32.totalorder %s86, 0
      %s89 = sadd.s32 %s88, 1
      %s90 = scalar_select %p87, %s88, %s89
      %p93 = pneg %p87
      %p94 = scmp.eq.s32.totalorder %s12, 7
      %p95 = por %p93, %p94
      %p96 = scmp.ne.s32.totalorder %s88, %s91
      %p97 = scmp.eq.s32.totalorder %s12, 0
      %p98 = por %p96, %p97
      %p99 = scmp.ne.s32.totalorder %s88, %s91
      %p100 = scmp.eq.s32.totalorder %s17, 7
      %p101 = por %p99, %p100
      %p102 = scmp.ne.s32.totalorder %s91, %s92
      %p103 = scmp.eq.s32.totalorder %s17, 0
      %p104 = por %p102, %p103
      %p105 = scmp.ne.s32.totalorder %s91, %s92
      %p106 = scmp.eq.s32.totalorder %s18, 7
      %p107 = por %p105, %p106
      %p109 = scmp.ne.s32.totalorder %s92, %s108
      %p110 = scmp.eq.s32.totalorder %s18, 0
      %p111 = por %p109, %p110
      %p112 = scmp.le.s32.totalorder 1, %s12
      %p113 = scmp.lt.s32.totalorder %s12, 9
      %p114 = pnand %p112, %p113
      %p115 = pneg %p114
      // Predicated region
      $region9: #{tpu_custom_call.1} parent=5 // pred_check
        _
      $region10: #{tpu_custom_call.1} parent=5 // pred_check_branch
        %117 = sbr.rel (%p114) target = $region12
      $region11: #{tpu_custom_call.1} parent=5 // pred_region
        %s118 = ssub.s32 %s12, 1
      $region12: #{tpu_custom_call.1} parent=5 // pred_fallthru
        _
      %p119 = scmp.lt.s32.totalorder %s12, 8
      // Predicated region
      $region13: #{tpu_custom_call.1} parent=5 // pred_check
        %p120 = pneg %p119
      $region14: #{tpu_custom_call.1} parent=5 // pred_check_branch
        %122 = sbr.rel (%p120) target = $region16
      $region15: #{tpu_custom_call.1} parent=5 // pred_region
        // Predicated region
        $region17: #{tpu_custom_call.1} parent=15 // pred_check
          %p123 = pneg %p46
        $region18: #{tpu_custom_call.1} parent=15 // pred_check_branch
          %125 = sbr.rel (%p123) target = $region20
        $region19: #{tpu_custom_call.1} parent=15 // pred_region
          %s126 = sand.u32 %s36, 1
          %s127 = scalar_lea.sflag [#allocation7], %s126
          %s128 = sand.u32 %s36, 1
          %s129 = smul.addr %s128, 8
          %s130 = scalar_lea.vmem [#allocation6], %s129
          %132 = vsyncadd %s127, 0
          %s133 = smul.addr %s19, 4
          %s134 = sadd.s32 %s20, %s133
          %s135 = smul.addr %s134, 8
          %s136 = scalar_lea.hbm %s0, %s135
          %s138 = sshll.u32 %s136, 4
          %s139 = int_to_ptr.hbm [resolvable:$true] %s138
          %s140 = sshll.u32 %s130, 4
          %s141 = int_to_ptr.vmem [resolvable:$true] %s140
          %143 = dma.hbm_to_vmem [thread:$0]  %s139, 128, %s141, %s127
        $region20: #{tpu_custom_call.1} parent=15 // pred_fallthru
          _
      $region16: #{tpu_custom_call.1} parent=5 // pred_fallthru
        _
      %p144 = scmp.le.s32.totalorder 1, %s12
      %p145 = scmp.lt.s32.totalorder %s12, 9
      %p146 = pnand %p144, %p145
      %p147 = pneg %p146
      // Predicated region
      $region21: #{tpu_custom_call.1} parent=5 // pred_check
        _
      $region22: #{tpu_custom_call.1} parent=5 // pred_check_branch
        %149 = sbr.rel (%p146) target = $region24
      $region23: #{tpu_custom_call.1} parent=5 // pred_region
        %s150 = ssub.s32 %s12, 1
        %s151 = sand.u32 %s39, 1
        %s152 = scalar_lea.sflag [#allocation7], %s151
        %s153 = sand.u32 %s39, 1
        %s154 = smul.addr %s153, 8
        %s155 = scalar_lea.vmem [#allocation6], %s154
        // Predicated region
        $region25: #{tpu_custom_call.1} parent=23 // pred_check
          %p156 = pneg %p52
        $region26: #{tpu_custom_call.1} parent=23 // pred_check_branch
          %158 = sbr.rel (%p156) target = $region28
        $region27: #{tpu_custom_call.1} parent=23 // pred_region
          %160 = dma.done %s152, 128
        $region28: #{tpu_custom_call.1} parent=23 // pred_fallthru
          _
        %s161 = sand.u32 %s39, 1
        %s162 = scalar_lea.sflag [#allocation7], %s161
        %s163 = sand.u32 %s39, 1
        %s164 = smul.addr %s163, 8
        %s165 = scalar_lea.vmem [#allocation6], %s164
        %p166 = pneg %p52
        %p167 = pneg %p49
        %p168 = pneg %p78
        %p169 = pneg %p75
        %p170 = scmp.lt.s32.totalorder %s21, 1
        %s171 = scalar_select %p170, %s21, 1
        %s172 = smul.addr %s171, 8
        %s173 = scalar_lea.vmem %s1, %s172
        %p174 = pneg %p104
        %p175 = pneg %p101
        %p176 = scmp.lt.s32.totalorder %s21, 1
        %s177 = scalar_select %p176, %s21, 1
        %s178 = smul.addr %s177, 8
        %s179 = scalar_lea.vmem %s2, %s178
        %p180 = scmp.lt.s32.totalorder %s21, 1
        %s181 = scalar_select %p180, %s21, 1
        %s182 = smul.addr %s181, 8
        %s183 = scalar_lea.vmem %s1, %s182
        %p184 = scmp.lt.s32.totalorder %s21, 1
        %s185 = scalar_select %p184, %s21, 1
        %s186 = smul.addr %s185, 8
        %s187 = scalar_lea.vmem %s2, %s186
        %p188 = scmp.eq.s32.totalorder %s22, 0
        // Predicated region
        $region29: #{tpu_custom_call.1} parent=23 // pred_check
          %p189 = pneg %p188
        $region30: #{tpu_custom_call.1} parent=23 // pred_check_branch
          %191 = sbr.rel (%p189) target = $region32
        $region31: #{tpu_custom_call.1} parent=23 // pred_region
          %192 = vst [vmem:[#allocation2] sm:$0xff] -inf
          %193 = vst [vmem:[#allocation3] sm:$0xff] 2147483647
        $region32: #{tpu_custom_call.1} parent=23 // pred_fallthru
          _
        %v194 = vlaneseq
        %v195 = vand.u32 %v194, 127
        %s196 = smul.u32 %s22, 128
        %v197 = vstv %s196
        %v198 = vadd.s32 %v195, %v197
        %v199 = vld [vmem:[%s155] sm:$0xff]
        %200 = vmax.xlane.f32.xlu0 %v199
        %v201 = vpop.xlane.xlu0 %200
        %vm202 = vcmp.eq.f32.partialorder %v199, %v201
        %v203 = vsel %vm202, %v198, 2147483647
        %v204 = vand.u32 %v203, 65535
        %v205 = vshra.s32 %v203, 16
        %v206 = vcvt.s32.f32 %v204
        %v207 = vcvt.s32.f32 %v205
        %208 = vmin.xlane.f32.xlu0 %v207
        %v209 = vpop.xlane.xlu0 %208
        %vm210 = vcmp.eq.f32.partialorder %v207, %v209
        %v211 = vsel %vm210, %v206, inf
        %212 = vmin.xlane.f32.xlu0 %v211
        %v213 = vpop.xlane.xlu0 %212
        %v214 = vcvt.f32.s32 %v213
        %v215 = vcvt.f32.s32 %v209
        %v216 = vshll.u32 %v215, 16
        %v217 = vadd.s32 %v216, %v214
        %vm218 = vcmask 31768
        %219 = vst.msk [vmem:[#allocation2] sm:$0xff] %vm218, %v201
        %220 = vst.msk [vmem:[#allocation3] sm:$0xff] %vm218, %v217
        %vm221 = vcmp.eq.s32.totalorder %v198, %v217
        %v222 = vsel %vm221, -inf, %v199
        %223 = vst [vmem:[#allocation4] sm:$0xff] %v222
        %v224 = vsel %vm221, 2147483647, %v198
        %225 = vst [vmem:[#allocation5] sm:$0xff] %v224
        %v226 = vld [vmem:[#allocation4] sm:$0xff]
        %v227 = vld [vmem:[#allocation5] sm:$0xff]
        %228 = vmax.xlane.f32.xlu0 %v226
        %v229 = vpop.xlane.xlu0 %228
        %vm230 = vcmp.eq.f32.partialorder %v226, %v229
        %v231 = vsel %vm230, %v227, 2147483647
        %v232 = vand.u32 %v231, 65535
        %v233 = vshra.s32 %v231, 16
        %v234 = vcvt.s32.f32 %v232
        %v235 = vcvt.s32.f32 %v233
        %236 = vmin.xlane.f32.xlu0 %v235
        %v237 = vpop.xlane.xlu0 %236
        %vm238 = vcmp.eq.f32.partialorder %v235, %v237
        %v239 = vsel %vm238, %v234, inf
        %240 = vmin.xlane.f32.xlu0 %v239
        %v241 = vpop.xlane.xlu0 %240
        %v242 = vcvt.f32.s32 %v241
        %v243 = vcvt.f32.s32 %v237
        %v244 = vshll.u32 %v243, 16
        %v245 = vadd.s32 %v244, %v242
        %vm246 = vcmask 39968
        %247 = vst.msk [vmem:[#allocation2] sm:$0xff] %vm246, %v229
        %248 = vst.msk [vmem:[#allocation3] sm:$0xff] %vm246, %v245
        %vm249 = vcmp.eq.s32.totalorder %v227, %v245
        %v250 = vsel %vm249, -inf, %v226
        %251 = vst [vmem:[#allocation4] sm:$0xff] %v250
        %v252 = vsel %vm249, 2147483647, %v227
        %253 = vst [vmem:[#allocation5] sm:$0xff] %v252
        %v254 = vld [vmem:[#allocation4] sm:$0xff]
        %v255 = vld [vmem:[#allocation5] sm:$0xff]
        %256 = vmax.xlane.f32.xlu0 %v254
        %v257 = vpop.xlane.xlu0 %256
        %vm258 = vcmp.eq.f32.partialorder %v254, %v257
        %v259 = vsel %vm258, %v255, 2147483647
        %v260 = vand.u32 %v259, 65535
        %v261 = vshra.s32 %v259, 16
        %v262 = vcvt.s32.f32 %v260
        %v263 = vcvt.s32.f32 %v261
        %264 = vmin.xlane.f32.xlu0 %v263
        %v265 = vpop.xlane.xlu0 %264
        %vm266 = vcmp.eq.f32.partialorder %v263, %v265
        %v267 = vsel %vm266, %v262, inf
        %268 = vmin.xlane.f32.xlu0 %v267
        %v269 = vpop.xlane.xlu0 %268
        %v270 = vcvt.f32.s32 %v269
        %v271 = vcvt.f32.s32 %v265
        %v272 = vshll.u32 %v271, 16
        %v273 = vadd.s32 %v272, %v270
        %vm274 = vcmask 48168
        %275 = vst.msk [vmem:[#allocation2] sm:$0xff] %vm274, %v257
        %276 = vst.msk [vmem:[#allocation3] sm:$0xff] %vm274, %v273
        %v277 = vld [vmem:[#allocation2] sm:$0xff]
        %v278 = vld [vmem:[#allocation3] sm:$0xff]
        %279 = vmax.xlane.f32.xlu0 %v277
        %v280 = vpop.xlane.xlu0 %279
        %vm281 = vcmp.eq.f32.partialorder %v277, %v280
        %v282 = vsel %vm281, %v278, 2147483647
        %v283 = vand.u32 %v282, 65535
        %v284 = vshra.s32 %v282, 16
        %v285 = vcvt.s32.f32 %v283
        %v286 = vcvt.s32.f32 %v284
        %287 = vmin.xlane.f32.xlu0 %v286
        %v288 = vpop.xlane.xlu0 %287
        %vm289 = vcmp.eq.f32.partialorder %v286, %v288
        %v290 = vsel %vm289, %v285, inf
        %291 = vmin.xlane.f32.xlu0 %v290
        %v292 = vpop.xlane.xlu0 %291
        %v293 = vcvt.f32.s32 %v292
        %v294 = vcvt.f32.s32 %v288
        %v295 = vshll.u32 %v294, 16
        %v296 = vadd.s32 %v295, %v293
        %vm297 = vcmask 7168
        %298 = vst.msk [vmem:[#allocation2] sm:$0xff] %vm297, %v280
        %299 = vst.msk [vmem:[#allocation3] sm:$0xff] %vm297, %v296
        %vm300 = vcmp.eq.s32.totalorder %v278, %v296
        %v301 = vsel %vm300, -inf, %v277
        %v302 = vsel %vm300, 2147483647, %v278
        %303 = vmax.xlane.f32.xlu0 %v301
        %v304 = vpop.xlane.xlu0 %303
        %vm305 = vcmp.eq.f32.partialorder %v301, %v304
        %v306 = vsel %vm305, %v302, 2147483647
        %v307 = vand.u32 %v306, 65535
        %v308 = vshra.s32 %v306, 16
        %v309 = vcvt.s32.f32 %v307
        %v310 = vcvt.s32.f32 %v308
        %311 = vmin.xlane.f32.xlu0 %v310
        %v312 = vpop.xlane.xlu0 %311
        %vm313 = vcmp.eq.f32.partialorder %v310, %v312
        %v314 = vsel %vm313, %v309, inf
        %315 = vmin.xlane.f32.xlu0 %v314
        %v316 = vpop.xlane.xlu0 %315
        %v317 = vcvt.f32.s32 %v316
        %v318 = vcvt.f32.s32 %v312
        %v319 = vshll.u32 %v318, 16
        %v320 = vadd.s32 %v319, %v317
        %vm321 = vcmask 15368
        %322 = vst.msk [vmem:[#allocation2] sm:$0xff] %vm321, %v304
        %323 = vst.msk [vmem:[#allocation3] sm:$0xff] %vm321, %v320
        %vm324 = vcmp.eq.s32.totalorder %v302, %v320
        %v325 = vsel %vm324, -inf, %v301
        %v326 = vsel %vm324, 2147483647, %v302
        %327 = vmax.xlane.f32.xlu0 %v325
        %v328 = vpop.xlane.xlu0 %327
        %vm329 = vcmp.eq.f32.partialorder %v325, %v328
        %v330 = vsel %vm329, %v326, 2147483647
        %v331 = vand.u32 %v330, 65535
        %v332 = vshra.s32 %v330, 16
        %v333 = vcvt.s32.f32 %v331
        %v334 = vcvt.s32.f32 %v332
        %335 = vmin.xlane.f32.xlu0 %v334
        %v336 = vpop.xlane.xlu0 %335
        %vm337 = vcmp.eq.f32.partialorder %v334, %v336
        %v338 = vsel %vm337, %v333, inf
        %339 = vmin.xlane.f32.xlu0 %v338
        %v340 = vpop.xlane.xlu0 %339
        %v341 = vcvt.f32.s32 %v340
        %v342 = vcvt.f32.s32 %v336
        %v343 = vshll.u32 %v342, 16
        %v344 = vadd.s32 %v343, %v341
        %vm345 = vcmask 23568
        %346 = vst.msk [vmem:[#allocation2] sm:$0xff] %vm345, %v328
        %347 = vst.msk [vmem:[#allocation3] sm:$0xff] %vm345, %v344
        %p348 = scmp.eq.s32.totalorder %s22, 3
        // Predicated region
        $region33: #{tpu_custom_call.1} parent=23 // pred_check
          %p349 = pneg %p348
        $region34: #{tpu_custom_call.1} parent=23 // pred_check_branch
          %351 = sbr.rel (%p349) target = $region36
        $region35: #{tpu_custom_call.1} parent=23 // pred_region
          %v352 = vld [vmem:[#allocation2] sm:$0xff]
          %vm353 = vcmask 23552
          %354 = vst.msk [vmem:[%s183] sm:$0xff] %vm353, %v352
          %v355 = vld [vmem:[#allocation3] sm:$0xff]
          %356 = vst.msk [vmem:[%s187] sm:$0xff] %vm353, %v355
        $region36: #{tpu_custom_call.1} parent=23 // pred_fallthru
          _
        %p357 = scmp.lt.s32.totalorder %s21, 1
        %s358 = scalar_select %p357, %s21, 1
        %s359 = smul.addr %s358, 8
        %s360 = scalar_lea.vmem %s1, %s359
        %p361 = scmp.lt.s32.totalorder %s21, 1
        %s362 = scalar_select %p361, %s21, 1
        %s363 = smul.addr %s362, 8
        %s364 = scalar_lea.vmem %s2, %s363
        // Predicated region
        $region37: #{tpu_custom_call.1} parent=23 // pred_check
          %p365 = pneg %p75
        $region38: #{tpu_custom_call.1} parent=23 // pred_check_branch
          %367 = sbr.rel (%p365) target = $region40
        $region39: #{tpu_custom_call.1} parent=23 // pred_region
          _
        $region40: #{tpu_custom_call.1} parent=23 // pred_fallthru
          _
        // Predicated region
        $region41: #{tpu_custom_call.1} parent=23 // pred_check
          %p368 = pneg %p101
        $region42: #{tpu_custom_call.1} parent=23 // pred_check_branch
          %370 = sbr.rel (%p368) target = $region44
        $region43: #{tpu_custom_call.1} parent=23 // pred_region
          _
        $region44: #{tpu_custom_call.1} parent=23 // pred_fallthru
          _
      $region24: #{tpu_custom_call.1} parent=5 // pred_fallthru
        _
      %p371 = scmp.le.s32.totalorder 2, %s12
      // Predicated region
      $region45: #{tpu_custom_call.1} parent=5 // pred_check
        %p372 = pneg %p371
      $region46: #{tpu_custom_call.1} parent=5 // pred_check_branch
        %374 = sbr.rel (%p372) target = $region48
      $region47: #{tpu_custom_call.1} parent=5 // pred_region
        %s375 = ssub.s32 %s12, 2
        // Predicated region
        $region49: #{tpu_custom_call.1} parent=47 // pred_check
          %p376 = pneg %p81
        $region50: #{tpu_custom_call.1} parent=47 // pred_check_branch
          %378 = sbr.rel (%p376) target = $region52
        $region51: #{tpu_custom_call.1} parent=47 // pred_region
          %p379 = scmp.lt.s32.totalorder %s23, 1
          %s380 = scalar_select %p379, %s23, 1
          %s381 = smul.addr %s380, 8
          %s382 = scalar_lea.vmem %s1, %s381
        $region52: #{tpu_custom_call.1} parent=47 // pred_fallthru
          _
        // Predicated region
        $region53: #{tpu_custom_call.1} parent=47 // pred_check
          %p383 = pneg %p107
        $region54: #{tpu_custom_call.1} parent=47 // pred_check_branch
          %385 = sbr.rel (%p383) target = $region56
        $region55: #{tpu_custom_call.1} parent=47 // pred_region
          %p386 = scmp.lt.s32.totalorder %s23, 1
          %s387 = scalar_select %p386, %s23, 1
          %s388 = smul.addr %s387, 8
          %s389 = scalar_lea.vmem %s2, %s388
        $region56: #{tpu_custom_call.1} parent=47 // pred_fallthru
          _
      $region48: #{tpu_custom_call.1} parent=5 // pred_fallthru
        _
    $region6: #{tpu_custom_call.1} parent=1 // loop_footer
      %s16 = sadd.s32 1, %s12
    $region7: #{tpu_custom_call.1} parent=1 // loop_footer_branch
      %11 = sbr.rel target = $region3
    $region8: #{tpu_custom_call.1} parent=1 // loop_exit
      _
    %390 = vsyncpa [#allocation7], 1
    %s391 = scalar_lea.sflag [#allocation7], 1
    %392 = vsyncpa %s391, 1

</llo_original>
